<compile_context>
chip_gen: v5e
topology: v5e:2x2
jax: 0.10.0
libtpu: 0.0.40
codegen_flags: <defaults>
</compile_context>

<pallas_src>
import functools

import jax
import jax.numpy as jnp
from jax import lax
from jax.experimental import pallas as pl
from jax.experimental.pallas import tpu as pltpu


def _fcn_head_kernel(x_ref, w_ref, mask_ref, bias_ref, wc_ref, bc_ref, o_ref, acc_ref,
                     *, H, W, Cmid, K, dilation):
    # x_ref:    (1, cin_tile, HW)        one image, one Cin tile (bf16/f32 MXU operand)
    # w_ref:    (1, K*K*Cmid, cin_tile)  stacked tap weights for this Cin tile (BN folded)
    # mask_ref: (K*K, HW) f32            per-tap border masks (1 = source pixel in bounds)
    # bias_ref: (Cmid, 1) f32            folded BN bias (beta - mean*scale + conv_bias*scale)
    # wc_ref:   (Cmid, 1) f32            1x1 classifier weight
    # bc_ref:   (1,) f32                 classifier bias (SMEM scalar)
    # o_ref:    (1, 1, HW) f32           lane-dense output slab
    # acc_ref:  (Cmid, HW) f32           VMEM accumulator (persists across Cin grid steps)
    HW = H * W
    c_idx = pl.program_id(1)

    x = x_ref[0]                                   # (cin_tile, HW)
    w = w_ref[0]                                   # (K*K*Cmid, cin_tile)

    # One MXU matmul per Cin tile for ALL K*K taps; f32 accumulation.
    y_all = jnp.dot(w, x, preferred_element_type=jnp.float32)   # (K*K*Cmid, HW)

    masks = mask_ref[...]                          # (K*K, HW) f32
    half = K // 2
    partial = None
    for t in range(K * K):                         # statically unrolled taps
        oy = dilation * (t // K - half)
        ox = dilation * (t % K - half)
        s = oy * W + ox
        yt = y_all[t * Cmid:(t + 1) * Cmid, :]     # (Cmid, HW) slice of the stacked result
        if s != 0:
            # roll-after-matmul: shift commutes with the channel contraction
            yt = pltpu.roll(yt, shift=(-s) % HW, axis=1)
        if not (oy == 0 and ox == 0):
            # Zero contributions whose source pixel is outside the image (implicit zero-pad).
            yt = yt * masks[t:t + 1, :]
        partial = yt if partial is None else partial + yt

    @pl.when(c_idx == 0)
    def _():
        acc_ref[...] = partial                     # init from first Cin tile (no zero-fill)

    @pl.when(c_idx > 0)
    def _():
        acc_ref[...] = acc_ref[...] + partial

    @pl.when(c_idx == pl.num_programs(1) - 1)
    def _():
        # Fused BatchNorm bias + ReLU (lane-dense f32 VPU work).
        y = jnp.maximum(acc_ref[...] + bias_ref[...], 0.0)                  # (Cmid, HW)
        # 1x1 classifier: per-channel scale (VPU) + cross-sublane reduce (XLU); no MXU.
        out = jnp.sum(y * wc_ref[...], axis=0, keepdims=True) + bc_ref[0]   # (1, HW)
        o_ref[...] = out.reshape(1, 1, HW)


def _pick_cin_tile(cin, requested):
    if requested is not None:
        return requested
    if cin <= 512:
        return cin
    for t in (512, 384, 256, 128, 64, 32, 16, 8):
        if cin % t == 0:
            return t
    return cin


def fcn_head_forward(x_nchw, params, *, kernel_size=3, dilation=1, eps=1e-5,
                     cin_tile=None, mxu_dtype=jnp.bfloat16):
    """x_nchw: (N, Cin, H, W) float32. Returns (N, 1, H, W) float32."""
    w_conv, b_conv, gamma, beta, run_mean, run_var, w_cls, b_cls = params
    N, Cin, H, W = x_nchw.shape
    Cmid = w_conv.shape[0]
    K = kernel_size
    assert K % 2 == 1, "odd kernel_size required for 'same'-sized output"
    assert dilation >= 1
    HW = H * W
    KKC = K * K * Cmid

    cin_tile = _pick_cin_tile(Cin, cin_tile)
    assert Cin % cin_tile == 0, (Cin, cin_tile)
    assert cin_tile == Cin or cin_tile % 8 == 0, cin_tile
    num_ct = Cin // cin_tile

    # ---- parameter folding + layout prep (tiny, plain JAX) ----
    scale = gamma / jnp.sqrt(run_var + eps)                               # (Cmid,)
    w_folded = w_conv * scale[:, None, None, None]                        # BN scale -> conv W
    # Stack all taps into one (K*K*Cmid, Cin) matrix, then split Cin into tiles so every
    # BlockSpec dim is either full-extent or lane/sublane aligned.
    w_stacked = jnp.transpose(w_folded, (2, 3, 0, 1)).reshape(KKC, Cin)
    w_tiled = w_stacked.reshape(KKC, num_ct, cin_tile).transpose(1, 0, 2)  # (num_ct,KKC,ct)
    w_tiled = w_tiled.astype(mxu_dtype)
    bias = (beta - run_mean * scale + b_conv * scale).reshape(Cmid, 1).astype(jnp.float32)
    wc = w_cls.reshape(Cmid, 1).astype(jnp.float32)
    bc = b_cls.reshape(1).astype(jnp.float32)                             # (1,) -> SMEM

    # Per-tap border masks (channel independent): 1 where source pixel (h+oy, w+ox) in-bounds.
    pos = jnp.arange(HW, dtype=jnp.int32)
    hh, ww = pos // W, pos % W
    half = K // 2
    mask_rows = []
    for t in range(K * K):
        oy = dilation * (t // K - half)
        ox = dilation * (t % K - half)
        sh, sw = hh + oy, ww + ox
        valid = (sh >= 0) & (sh < H) & (sw >= 0) & (sw < W)
        mask_rows.append(valid.astype(jnp.float32))
    masks = jnp.stack(mask_rows)                                          # (K*K, HW)

    # Layout-preserving reshape + MXU-operand cast (no transpose / padding pass).
    x_flat = x_nchw.reshape(N, Cin, HW).astype(mxu_dtype)

    kernel = functools.partial(_fcn_head_kernel, H=H, W=W, Cmid=Cmid, K=K,
                               dilation=dilation)

    out = pl.pallas_call(
        kernel,
        out_shape=jax.ShapeDtypeStruct((N, 1, HW), jnp.float32),
        grid_spec=pltpu.PrefetchScalarGridSpec(
            num_scalar_prefetch=0,
            grid=(N, num_ct),
            in_specs=[
                pl.BlockSpec((1, cin_tile, HW), lambda n, c: (n, c, 0)),     # x tile
                pl.BlockSpec((1, KKC, cin_tile), lambda n, c: (c, 0, 0)),    # stacked W tile
                pl.BlockSpec((K * K, HW), lambda n, c: (0, 0)),              # border masks
                pl.BlockSpec((Cmid, 1), lambda n, c: (0, 0)),                # folded BN bias
                pl.BlockSpec((Cmid, 1), lambda n, c: (0, 0)),                # classifier W
                pl.BlockSpec(memory_space=pltpu.MemorySpace.SMEM),           # classifier bias
            ],
            out_specs=pl.BlockSpec((1, 1, HW), lambda n, c: (n, 0, 0)),
            scratch_shapes=[pltpu.VMEM((Cmid, HW), jnp.float32)],
        ),
        compiler_params=pltpu.CompilerParams(
            dimension_semantics=("parallel", "arbitrary"),
            vmem_limit_bytes=48 * 1024 * 1024,
        ),
    )(x_flat, w_tiled, masks, bias, wc, bc)

    return out.reshape(N, 1, H, W)                                        # free reshape


def _reference_forward(x_nchw, params, *, kernel_size=3, dilation=1, eps=1e-5):
    """Pure-JAX reference matching PyTorch eval-mode FCNHead (f32 end to end)."""
    w_conv, b_conv, gamma, beta, run_mean, run_var, w_cls, b_cls = params
    pad = (kernel_size // 2) * dilation
    y = lax.conv_general_dilated(
        x_nchw, w_conv, window_strides=(1, 1),
        padding=((pad, pad), (pad, pad)), rhs_dilation=(dilation, dilation),
        dimension_numbers=("NCHW", "OIHW", "NCHW"))
    y = y + b_conv[None, :, None, None]
    y = (y - run_mean[None, :, None, None]) / jnp.sqrt(run_var[None, :, None, None] + eps)
    y = y * gamma[None, :, None, None] + beta[None, :, None, None]
    y = jnp.maximum(y, 0.0)
    out = lax.conv_general_dilated(
        y, w_cls, window_strides=(1, 1), padding="VALID",
        dimension_numbers=("NCHW", "OIHW", "NCHW"))
    return out + b_cls[None, :, None, None]


if __name__ == "__main__":
    # Small shapes consistent with the module: in_channels=32 -> channels=32//4=8.
    N, Cin, H, W = 2, 32, 16, 16
    Cmid = Cin // 4
    K = 3

    key = jax.random.PRNGKey(0)
    ks = jax.random.split(key, 7)
    x = jax.random.normal(ks[0], (N, Cin, H, W), dtype=jnp.float32)

    # Deterministic synthetic parameters (BatchNorm in eval mode with running stats).
    w_conv = 0.1 * jax.random.normal(ks[1], (Cmid, Cin, K, K), dtype=jnp.float32)
    b_conv = 0.05 * jax.random.normal(ks[2], (Cmid,), dtype=jnp.float32)
    gamma = 1.0 + 0.1 * jax.random.normal(ks[3], (Cmid,), dtype=jnp.float32)
    beta = 0.1 * jax.random.normal(ks[4], (Cmid,), dtype=jnp.float32)
    run_mean = 0.05 * jnp.arange(Cmid, dtype=jnp.float32)
    run_var = 1.0 + 0.02 * jnp.arange(Cmid, dtype=jnp.float32)
    w_cls = 0.1 * jax.random.normal(ks[5], (1, Cmid, 1, 1), dtype=jnp.float32)
    b_cls = 0.05 * jax.random.normal(ks[6], (1,), dtype=jnp.float32)

    params = (w_conv, b_conv, gamma, beta, run_mean, run_var, w_cls, b_cls)

    # bf16 MXU operands, 2-step Cin accumulation (cin_tile=16), dilation=1 (module default).
    out = jax.block_until_ready(
        fcn_head_forward(x, params, kernel_size=K, dilation=1, cin_tile=16))
    ref = _reference_forward(x, params, kernel_size=K, dilation=1)
    assert out.shape == (N, 1, H, W), out.shape
    assert jnp.allclose(out, ref, rtol=3e-2, atol=3e-2), float(jnp.max(jnp.abs(out - ref)))

    # dilation=2 exercises the dilated-tap roll/mask path.
    out2 = jax.block_until_ready(
        fcn_head_forward(x, params, kernel_size=K, dilation=2, cin_tile=16))
    ref2 = _reference_forward(x, params, kernel_size=K, dilation=2)
    assert jnp.allclose(out2, ref2, rtol=3e-2, atol=3e-2), float(jnp.max(jnp.abs(out2 - ref2)))

    # f32 MXU operands: tight structural check of the roll/mask/Cin-accumulation path.
    out3 = jax.block_until_ready(
        fcn_head_forward(x, params, kernel_size=K, dilation=1, cin_tile=16,
                         mxu_dtype=jnp.float32))
    assert jnp.allclose(out3, ref, rtol=1e-3, atol=1e-3), float(jnp.max(jnp.abs(out3 - ref)))

    print("KERNEL_OK")
</pallas_src>

<mosaic_0001>
module attributes {stable_mosaic.version = 11 : i64} {
  func.func @_fcn_head_kernel(%arg0: i32, %arg1: i32, %arg2: memref<1x16x256xbf16, #tpu.memory_space<vmem>>, %arg3: memref<1x72x16xbf16, #tpu.memory_space<vmem>>, %arg4: memref<9x256xf32, #tpu.memory_space<vmem>>, %arg5: memref<8x1xf32, #tpu.memory_space<vmem>>, %arg6: memref<8x1xf32, #tpu.memory_space<vmem>>, %arg7: memref<1xf32, #tpu.memory_space<smem>>, %arg8: memref<1x1x256xf32, #tpu.memory_space<vmem>>, %arg9: memref<8x256xf32, #tpu.memory_space<vmem>>) attributes {dimension_semantics = [#tpu.dimension_semantics<parallel>, #tpu.dimension_semantics<arbitrary>], iteration_bounds = array<i64: 2, 2>, scalar_prefetch = 0 : i64, scratch_operands = 1 : i64, tpu.core_type = #tpu.core_type<tc>, window_params = [{transform_indices = @transform_0, window_bounds = array<i64: 1, 16, 256>}, {transform_indices = @transform_1, window_bounds = array<i64: 1, 72, 16>}, {pipeline_mode = #tpu.pipeline_mode<synchronous>, transform_indices = @transform_2, window_bounds = array<i64: 9, 256>}, {pipeline_mode = #tpu.pipeline_mode<synchronous>, transform_indices = @transform_3, window_bounds = array<i64: 8, 1>}, {pipeline_mode = #tpu.pipeline_mode<synchronous>, transform_indices = @transform_4, window_bounds = array<i64: 8, 1>}, {transform_indices = @transform_5, window_bounds = array<i64: 1>}, {transform_indices = @transform_6, window_bounds = array<i64: 1, 1, 256>}]} {
    %c0 = arith.constant 0 : index
    %c0_0 = arith.constant 0 : index
    %c0_1 = arith.constant 0 : index
    %0 = vector.load %arg2[%c0, %c0_0, %c0_1] : memref<1x16x256xbf16, #tpu.memory_space<vmem>>, vector<1x16x256xbf16>
    %1 = vector.shape_cast %0 : vector<1x16x256xbf16> to vector<16x256xbf16>
    %c0_2 = arith.constant 0 : index
    %c0_3 = arith.constant 0 : index
    %c0_4 = arith.constant 0 : index
    %2 = vector.load %arg3[%c0_2, %c0_3, %c0_4] : memref<1x72x16xbf16, #tpu.memory_space<vmem>>, vector<1x72x16xbf16>
    %3 = vector.shape_cast %2 : vector<1x72x16xbf16> to vector<72x16xbf16>
    %cst = arith.constant dense<0.000000e+00> : vector<72x256xf32>
    %4 = tpu.matmul %3, %1, %cst {dimension_numbers = #tpu.dot_dimension_numbers<[1], [0], [0], [1], [0, 0, 1, 1], [], []>} : vector<72x16xbf16>, vector<16x256xbf16>, vector<72x256xf32> -> vector<72x256xf32>
    %c0_5 = arith.constant 0 : index
    %c0_6 = arith.constant 0 : index
    %5 = vector.load %arg4[%c0_5, %c0_6] : memref<9x256xf32, #tpu.memory_space<vmem>>, vector<9x256xf32>
    %6 = vector.extract_strided_slice %4 {offsets = [0, 0], sizes = [8, 256], strides = [1, 1]} : vector<72x256xf32> to vector<8x256xf32>
    %c17_i32 = arith.constant 17 : i32
    %7 = tpu.dynamic_rotate %6 by %c17_i32 dim 1 : vector<8x256xf32>, i32 -> vector<8x256xf32>
    %8 = vector.extract_strided_slice %5 {offsets = [0, 0], sizes = [1, 256], strides = [1, 1]} : vector<9x256xf32> to vector<1x256xf32>
    %9 = vector.broadcast %8 : vector<1x256xf32> to vector<8x256xf32>
    %10 = arith.mulf %7, %9 : vector<8x256xf32>
    %11 = vector.extract_strided_slice %4 {offsets = [8, 0], sizes = [8, 256], strides = [1, 1]} : vector<72x256xf32> to vector<8x256xf32>
    %c16_i32 = arith.constant 16 : i32
    %12 = tpu.dynamic_rotate %11 by %c16_i32 dim 1 : vector<8x256xf32>, i32 -> vector<8x256xf32>
    %13 = vector.extract_strided_slice %5 {offsets = [1, 0], sizes = [1, 256], strides = [1, 1]} : vector<9x256xf32> to vector<1x256xf32>
    %14 = vector.broadcast %13 : vector<1x256xf32> to vector<8x256xf32>
    %15 = arith.mulf %12, %14 : vector<8x256xf32>
    %16 = arith.addf %10, %15 : vector<8x256xf32>
    %17 = vector.extract_strided_slice %4 {offsets = [16, 0], sizes = [8, 256], strides = [1, 1]} : vector<72x256xf32> to vector<8x256xf32>
    %c15_i32 = arith.constant 15 : i32
    %18 = tpu.dynamic_rotate %17 by %c15_i32 dim 1 : vector<8x256xf32>, i32 -> vector<8x256xf32>
    %19 = vector.extract_strided_slice %5 {offsets = [2, 0], sizes = [1, 256], strides = [1, 1]} : vector<9x256xf32> to vector<1x256xf32>
    %20 = vector.broadcast %19 : vector<1x256xf32> to vector<8x256xf32>
    %21 = arith.mulf %18, %20 : vector<8x256xf32>
    %22 = arith.addf %16, %21 : vector<8x256xf32>
    %23 = vector.extract_strided_slice %4 {offsets = [24, 0], sizes = [8, 256], strides = [1, 1]} : vector<72x256xf32> to vector<8x256xf32>
    %c1_i32 = arith.constant 1 : i32
    %24 = tpu.dynamic_rotate %23 by %c1_i32 dim 1 : vector<8x256xf32>, i32 -> vector<8x256xf32>
    %25 = vector.extract_strided_slice %5 {offsets = [3, 0], sizes = [1, 256], strides = [1, 1]} : vector<9x256xf32> to vector<1x256xf32>
    %26 = vector.broadcast %25 : vector<1x256xf32> to vector<8x256xf32>
    %27 = arith.mulf %24, %26 : vector<8x256xf32>
    %28 = arith.addf %22, %27 : vector<8x256xf32>
    %29 = vector.extract_strided_slice %4 {offsets = [32, 0], sizes = [8, 256], strides = [1, 1]} : vector<72x256xf32> to vector<8x256xf32>
    %30 = arith.addf %28, %29 : vector<8x256xf32>
    %31 = vector.extract_strided_slice %4 {offsets = [40, 0], sizes = [8, 256], strides = [1, 1]} : vector<72x256xf32> to vector<8x256xf32>
    %c255_i32 = arith.constant 255 : i32
    %32 = tpu.dynamic_rotate %31 by %c255_i32 dim 1 : vector<8x256xf32>, i32 -> vector<8x256xf32>
    %33 = vector.extract_strided_slice %5 {offsets = [5, 0], sizes = [1, 256], strides = [1, 1]} : vector<9x256xf32> to vector<1x256xf32>
    %34 = vector.broadcast %33 : vector<1x256xf32> to vector<8x256xf32>
    %35 = arith.mulf %32, %34 : vector<8x256xf32>
    %36 = arith.addf %30, %35 : vector<8x256xf32>
    %37 = vector.extract_strided_slice %4 {offsets = [48, 0], sizes = [8, 256], strides = [1, 1]} : vector<72x256xf32> to vector<8x256xf32>
    %c241_i32 = arith.constant 241 : i32
    %38 = tpu.dynamic_rotate %37 by %c241_i32 dim 1 : vector<8x256xf32>, i32 -> vector<8x256xf32>
    %39 = vector.extract_strided_slice %5 {offsets = [6, 0], sizes = [1, 256], strides = [1, 1]} : vector<9x256xf32> to vector<1x256xf32>
    %40 = vector.broadcast %39 : vector<1x256xf32> to vector<8x256xf32>
    %41 = arith.mulf %38, %40 : vector<8x256xf32>
    %42 = arith.addf %36, %41 : vector<8x256xf32>
    %43 = vector.extract_strided_slice %4 {offsets = [56, 0], sizes = [8, 256], strides = [1, 1]} : vector<72x256xf32> to vector<8x256xf32>
    %c240_i32 = arith.constant 240 : i32
    %44 = tpu.dynamic_rotate %43 by %c240_i32 dim 1 : vector<8x256xf32>, i32 -> vector<8x256xf32>
    %45 = vector.extract_strided_slice %5 {offsets = [7, 0], sizes = [1, 256], strides = [1, 1]} : vector<9x256xf32> to vector<1x256xf32>
    %46 = vector.broadcast %45 : vector<1x256xf32> to vector<8x256xf32>
    %47 = arith.mulf %44, %46 : vector<8x256xf32>
    %48 = arith.addf %42, %47 : vector<8x256xf32>
    %49 = vector.extract_strided_slice %4 {offsets = [64, 0], sizes = [8, 256], strides = [1, 1]} : vector<72x256xf32> to vector<8x256xf32>
    %c239_i32 = arith.constant 239 : i32
    %50 = tpu.dynamic_rotate %49 by %c239_i32 dim 1 : vector<8x256xf32>, i32 -> vector<8x256xf32>
    %51 = vector.extract_strided_slice %5 {offsets = [8, 0], sizes = [1, 256], strides = [1, 1]} : vector<9x256xf32> to vector<1x256xf32>
    %52 = vector.broadcast %51 : vector<1x256xf32> to vector<8x256xf32>
    %53 = arith.mulf %50, %52 : vector<8x256xf32>
    %54 = arith.addf %48, %53 : vector<8x256xf32>
    %c0_i32 = arith.constant 0 : i32
    %55 = arith.cmpi eq, %arg1, %c0_i32 : i32
    %56 = arith.extui %55 : i1 to i32
    %c0_i32_7 = arith.constant 0 : i32
    %57 = arith.cmpi ne, %56, %c0_i32_7 : i32
    scf.if %57 {
      %c0_12 = arith.constant 0 : index
      %c0_13 = arith.constant 0 : index
      %64 = vector.load %arg9[%c0_12, %c0_13] : memref<8x256xf32, #tpu.memory_space<vmem>>, vector<8x256xf32>
      tpu.vector_store %arg9[%c0_12, %c0_13], %54 {strides = array<i32>} : memref<8x256xf32, #tpu.memory_space<vmem>>, vector<8x256xf32>,
    } else {
    }
    %c0_i32_8 = arith.constant 0 : i32
    %58 = arith.cmpi sgt, %arg1, %c0_i32_8 : i32
    %59 = arith.extui %58 : i1 to i32
    %c0_i32_9 = arith.constant 0 : i32
    %60 = arith.cmpi ne, %59, %c0_i32_9 : i32
    scf.if %60 {
      %c0_12 = arith.constant 0 : index
      %c0_13 = arith.constant 0 : index
      %64 = vector.load %arg9[%c0_12, %c0_13] : memref<8x256xf32, #tpu.memory_space<vmem>>, vector<8x256xf32>
      %65 = arith.addf %64, %54 : vector<8x256xf32>
      %c0_14 = arith.constant 0 : index
      %c0_15 = arith.constant 0 : index
      %66 = vector.load %arg9[%c0_14, %c0_15] : memref<8x256xf32, #tpu.memory_space<vmem>>, vector<8x256xf32>
      tpu.vector_store %arg9[%c0_14, %c0_15], %65 {strides = array<i32>} : memref<8x256xf32, #tpu.memory_space<vmem>>, vector<8x256xf32>,
    } else {
    }
    %c1_i32_10 = arith.constant 1 : i32
    %61 = arith.cmpi eq, %arg1, %c1_i32_10 : i32
    %62 = arith.extui %61 : i1 to i32
    %c0_i32_11 = arith.constant 0 : i32
    %63 = arith.cmpi ne, %62, %c0_i32_11 : i32
    scf.if %63 {
      %c0_12 = arith.constant 0 : index
      %c0_13 = arith.constant 0 : index
      %64 = vector.load %arg9[%c0_12, %c0_13] : memref<8x256xf32, #tpu.memory_space<vmem>>, vector<8x256xf32>
      %c0_14 = arith.constant 0 : index
      %c0_15 = arith.constant 0 : index
      %65 = vector.load %arg5[%c0_14, %c0_15] : memref<8x1xf32, #tpu.memory_space<vmem>>, vector<8x1xf32>
      %66 = vector.broadcast %65 : vector<8x1xf32> to vector<8x256xf32>
      %67 = arith.addf %64, %66 : vector<8x256xf32>
      %cst_16 = arith.constant 0.000000e+00 : f32
      %68 = vector.broadcast %cst_16 : f32 to vector<8x256xf32>
      %69 = arith.maximumf %67, %68 : vector<8x256xf32>
      %c0_17 = arith.constant 0 : index
      %c0_18 = arith.constant 0 : index
      %70 = vector.load %arg6[%c0_17, %c0_18] : memref<8x1xf32, #tpu.memory_space<vmem>>, vector<8x1xf32>
      %71 = vector.broadcast %70 : vector<8x1xf32> to vector<8x256xf32>
      %72 = arith.mulf %69, %71 : vector<8x256xf32>
      %cst_19 = arith.constant dense<0.000000e+00> : vector<256xf32>
      %73 = vector.multi_reduction <add>, %72, %cst_19 [0] : vector<8x256xf32> to vector<256xf32>
      %74 = vector.shape_cast %73 : vector<256xf32> to vector<1x256xf32>
      %c0_20 = arith.constant 0 : index
      %75 = memref.load %arg7[%c0_20] : memref<1xf32, #tpu.memory_space<smem>>
      %76 = vector.broadcast %75 : f32 to vector<1x256xf32>
      %77 = arith.addf %74, %76 : vector<1x256xf32>
      %78 = vector.shape_cast %77 : vector<1x256xf32> to vector<1x1x256xf32>
      %c0_21 = arith.constant 0 : index
      %c0_22 = arith.constant 0 : index
      %c0_23 = arith.constant 0 : index
      %79 = vector.load %arg8[%c0_21, %c0_22, %c0_23] : memref<1x1x256xf32, #tpu.memory_space<vmem>>, vector<1x1x256xf32>
      tpu.vector_store %arg8[%c0_21, %c0_22, %c0_23], %78 {strides = array<i32>} : memref<1x1x256xf32, #tpu.memory_space<vmem>>, vector<1x1x256xf32>,
    } else {
    }
    return
  }
  func.func @transform_0(%arg0: i32, %arg1: i32) -> (i32, i32, i32) {
    %c0_i32 = arith.constant 0 : i32
    %c0_i32_0 = arith.constant 0 : i32
    return %arg0, %arg1, %c0_i32 : i32, i32, i32
  }
  func.func @transform_1(%arg0: i32, %arg1: i32) -> (i32, i32, i32) {
    %c0_i32 = arith.constant 0 : i32
    %c0_i32_0 = arith.constant 0 : i32
    %c0_i32_1 = arith.constant 0 : i32
    return %arg1, %c0_i32, %c0_i32_0 : i32, i32, i32
  }
  func.func @transform_2(%arg0: i32, %arg1: i32) -> (i32, i32) {
    %c0_i32 = arith.constant 0 : i32
    %c0_i32_0 = arith.constant 0 : i32
    %c0_i32_1 = arith.constant 0 : i32
    return %c0_i32, %c0_i32_0 : i32, i32
  }
  func.func @transform_3(%arg0: i32, %arg1: i32) -> (i32, i32) {
    %c0_i32 = arith.constant 0 : i32
    %c0_i32_0 = arith.constant 0 : i32
    %c0_i32_1 = arith.constant 0 : i32
    return %c0_i32, %c0_i32_0 : i32, i32
  }
  func.func @transform_4(%arg0: i32, %arg1: i32) -> (i32, i32) {
    %c0_i32 = arith.constant 0 : i32
    %c0_i32_0 = arith.constant 0 : i32
    %c0_i32_1 = arith.constant 0 : i32
    return %c0_i32, %c0_i32_0 : i32, i32
  }
  func.func @transform_5(%arg0: i32, %arg1: i32) -> i32 {
    %c0_i32 = arith.constant 0 : i32
    %c0_i32_0 = arith.constant 0 : i32
    return %c0_i32 : i32
  }
  func.func @transform_6(%arg0: i32, %arg1: i32) -> (i32, i32, i32) {
    %c0_i32 = arith.constant 0 : i32
    %c0_i32_0 = arith.constant 0 : i32
    %c0_i32_1 = arith.constant 0 : i32
    return %arg0, %c0_i32, %c0_i32_0 : i32, i32, i32
  }
}

</mosaic_0001>

<llo_original>
// kernel: tpu_custom_call.1
$region0: #{tpu_custom_call.1}
  #allocation0 [shape = 'u32[]', space=smem, size = 0x4, offset = 0x4, fixed_abs, tag = 'smem constant byte address 0x4 - core index']
  #allocation1 [shape = 'u32[72,128]{1,0:T(1,128)}', space=vmem, size = 0x9000, scoped, tag = 'internal scratch']
  #allocation2 [shape = 'f32[8,256]{1,0:T(8,128)}', space=vmem, size = 0x2000, scoped, tag = 'scratch operand']
  #allocation3 [shape = 'f32[1]{0:T(128)S(6)}', space=smem, size = 0x200, scoped, tag = 'scoped memory for tpu_custom_call.1']
  %s0 = inlined_call_operand.vmem [shape: bf16[2,32,256], index: 0, kind: input, shape index: {}]
  %s1 = inlined_call_operand.vmem [shape: bf16[2,72,16], index: 1, kind: input, shape index: {}]
  %s2 = inlined_call_operand.hbm [shape: f32[9,256], index: 2, kind: input, shape index: {}]
  %s3 = inlined_call_operand.vmem [shape: f32[8,1], index: 3, kind: input, shape index: {}]
  %s4 = inlined_call_operand.vmem [shape: f32[8,1], index: 4, kind: input, shape index: {}]
  %s5 = inlined_call_operand.<no memory space> [shape: f32[1], index: 5, kind: input, shape index: {}]
  %s6 = inlined_call_operand.hbm [shape: f32[2,1,256], index: 6, kind: output, shape index: {}]
  %s7 = sld [smem:[#allocation0]]
  $region73: #{tpu_custom_call.1} parent=0
    _
  %s9 = ssub.s32 1, %s7
  %s10 = scalar_select 0, %s9, %s7
  %11 = sst [smem:[#allocation3]] %s5
  $region1: #{tpu_custom_call.1} parent=0
    #allocation4 [shape = 'u8[16384]{0}', space=vmem, size = 0x4000, scoped, tag = 'input window, operand 2, single buffered']
    #allocation5 [shape = 's32[2]{0}', space=sflag, size = 0x8, scoped, tag = 'scoped memory for tpu_custom_call.1']
    #allocation6 [shape = 's32[2]{0}', space=sflag, size = 0x8, scoped, tag = 'scoped memory for tpu_custom_call.1']
    #allocation7 [shape = 'u8[2048]{0}', space=vmem, size = 0x800, scoped, tag = 'output window, operand 0']
    %12 = vsyncpa [#allocation5], 0
    %13 = vsyncpa [#allocation6], 0
    %s14 = scalar_lea.sflag [#allocation6], 1
    %15 = vsyncpa %s14, 0
    loop: start=0, step=1, limit=6
    $region2: #{tpu_custom_call.1} parent=1 // loop_pre_header
      _
    $region3: #{tpu_custom_call.1} parent=1 // loop_header
      %s17 = sphi 0, %s21
      %p18 = scmp.ge.s32.totalorder %s17, 6
      %s24 = sphi 0, %s36
      %s25 = sphi 0, %s32
      %s26 = sphi 0, %s24
      %s27 = sphi 0, %s25
      %s28 = sphi 0, %s26
      %s29 = sphi 0, %s27
      %s41 = sphi 0, %s43
      %s44 = sphi 0, %s41
      %s45 = sphi 0, %s44
      %s61 = sphi 0, %s45
      %s67 = sphi 0, %s69
      %s70 = sphi 0, %s67
      %s71 = sphi 0, %s70
      %s87 = sphi 0, %s71
      %s91 = sphi 0, %s91
      %s93 = sphi 0, %s91
      %s94 = sphi 0, %s93
      %s108 = sphi 0, %s94
      %s112 = sphi 0, %s112
      %s114 = sphi 0, %s112
      %s115 = sphi 0, %s114
      %s129 = sphi 0, %s115
      %s133 = sphi 0, %s133
      %s135 = sphi 0, %s133
      %s136 = sphi 0, %s135
      %s150 = sphi 0, %s136
      %s154 = sphi 0, %s154
      %s156 = sphi 0, %s154
      %s157 = sphi 0, %s156
      %s171 = sphi 0, %s157
      %s177 = sphi 0, %s179
      %s180 = sphi 0, %s177
      %s181 = sphi 0, %s180
      %s197 = sphi 0, %s181
    $region4: #{tpu_custom_call.1} parent=1 // loop_header_branch
      %20 = sbr.rel (%p18) target = $region8
    $region5: #{tpu_custom_call.1} parent=1 // loop_body
      %s22 = ssub.s32 %s17, 1
      %s23 = ssub.s32 %s17, 2
      %s30 = sadd.s32 1, %s25
      %p31 = scmp.ge.s32.totalorder %s30, 2
      %s32 = scalar_select %p31, 0, %s30
      %s33 = sadd.s32 1, %s24
      %s34 = scalar_select %p31, %s33, %s24
      %p35 = scmp.ge.s32.totalorder %s34, 2
      %s36 = scalar_select %p35, 0, %s34
      %s37 = ssub.s32 %s24, %s36
      %s38 = ssub.s32 %s25, %s32
      %s39 = sor.u32 %s37, %s38
      %p40 = scmp.eq.s32.totalorder %s39, 0
      %s42 = sadd.s32 %s41, 1
      %s43 = scalar_select %p40, %s41, %s42
      %p46 = pneg %p40
      %p47 = scmp.eq.s32.totalorder %s17, 3
      %p48 = por %p46, %p47
      %p49 = scmp.ne.s32.totalorder %s41, %s44
      %p50 = scmp.eq.s32.totalorder %s17, 0
      %p51 = por %p49, %p50
      %p52 = scmp.ne.s32.totalorder %s41, %s44
      %p53 = scmp.eq.s32.totalorder %s22, 3
      %p54 = por %p52, %p53
      %p55 = scmp.ne.s32.totalorder %s44, %s45
      %p56 = scmp.eq.s32.totalorder %s22, 0
      %p57 = por %p55, %p56
      %p58 = scmp.ne.s32.totalorder %s44, %s45
      %p59 = scmp.eq.s32.totalorder %s23, 3
      %p60 = por %p58, %p59
      %p62 = scmp.ne.s32.totalorder %s45, %s61
      %p63 = scmp.eq.s32.totalorder %s23, 0
      %p64 = por %p62, %p63
      %s65 = ssub.s32 %s25, %s32
      %p66 = scmp.eq.s32.totalorder %s65, 0
      %s68 = sadd.s32 %s67, 1
      %s69 = scalar_select %p66, %s67, %s68
      %p72 = pneg %p66
      %p73 = scmp.eq.s32.totalorder %s17, 3
      %p74 = por %p72, %p73
      %p75 = scmp.ne.s32.totalorder %s67, %s70
      %p76 = scmp.eq.s32.totalorder %s17, 0
      %p77 = por %p75, %p76
      %p78 = scmp.ne.s32.totalorder %s67, %s70
      %p79 = scmp.eq.s32.totalorder %s22, 3
      %p80 = por %p78, %p79
      %p81 = scmp.ne.s32.totalorder %s70, %s71
      %p82 = scmp.eq.s32.totalorder %s22, 0
      %p83 = por %p81, %p82
      %p84 = scmp.ne.s32.totalorder %s70, %s71
      %p85 = scmp.eq.s32.totalorder %s23, 3
      %p86 = por %p84, %p85
      %p88 = scmp.ne.s32.totalorder %s71, %s87
      %p89 = scmp.eq.s32.totalorder %s23, 0
      %p90 = por %p88, %p89
      %s92 = sadd.s32 %s91, 1
      %p95 = scmp.eq.s32.totalorder %s17, 3
      %p96 = scmp.ne.s32.totalorder %s91, %s93
      %p97 = scmp.eq.s32.totalorder %s17, 0
      %p98 = por %p96, %p97
      %p99 = scmp.ne.s32.totalorder %s91, %s93
      %p100 = scmp.eq.s32.totalorder %s22, 3
      %p101 = por %p99, %p100
      %p102 = scmp.ne.s32.totalorder %s93, %s94
      %p103 = scmp.eq.s32.totalorder %s22, 0
      %p104 = por %p102, %p103
      %p105 = scmp.ne.s32.totalorder %s93, %s94
      %p106 = scmp.eq.s32.totalorder %s23, 3
      %p107 = por %p105, %p106
      %p109 = scmp.ne.s32.totalorder %s94, %s108
      %p110 = scmp.eq.s32.totalorder %s23, 0
      %p111 = por %p109, %p110
      %s113 = sadd.s32 %s112, 1
      %p116 = scmp.eq.s32.totalorder %s17, 3
      %p117 = scmp.ne.s32.totalorder %s112, %s114
      %p118 = scmp.eq.s32.totalorder %s17, 0
      %p119 = por %p117, %p118
      %p120 = scmp.ne.s32.totalorder %s112, %s114
      %p121 = scmp.eq.s32.totalorder %s22, 3
      %p122 = por %p120, %p121
      %p123 = scmp.ne.s32.totalorder %s114, %s115
      %p124 = scmp.eq.s32.totalorder %s22, 0
      %p125 = por %p123, %p124
      %p126 = scmp.ne.s32.totalorder %s114, %s115
      %p127 = scmp.eq.s32.totalorder %s23, 3
      %p128 = por %p126, %p127
      %p130 = scmp.ne.s32.totalorder %s115, %s129
      %p131 = scmp.eq.s32.totalorder %s23, 0
      %p132 = por %p130, %p131
      %s134 = sadd.s32 %s133, 1
      %p137 = scmp.eq.s32.totalorder %s17, 3
      %p138 = scmp.ne.s32.totalorder %s133, %s135
      %p139 = scmp.eq.s32.totalorder %s17, 0
      %p140 = por %p138, %p139
      %p141 = scmp.ne.s32.totalorder %s133, %s135
      %p142 = scmp.eq.s32.totalorder %s22, 3
      %p143 = por %p141, %p142
      %p144 = scmp.ne.s32.totalorder %s135, %s136
      %p145 = scmp.eq.s32.totalorder %s22, 0
      %p146 = por %p144, %p145
      %p147 = scmp.ne.s32.totalorder %s135, %s136
      %p148 = scmp.eq.s32.totalorder %s23, 3
      %p149 = por %p147, %p148
      %p151 = scmp.ne.s32.totalorder %s136, %s150
      %p152 = scmp.eq.s32.totalorder %s23, 0
      %p153 = por %p151, %p152
      %s155 = sadd.s32 %s154, 1
      %p158 = scmp.eq.s32.totalorder %s17, 3
      %p159 = scmp.ne.s32.totalorder %s154, %s156
      %p160 = scmp.eq.s32.totalorder %s17, 0
      %p161 = por %p159, %p160
      %p162 = scmp.ne.s32.totalorder %s154, %s156
      %p163 = scmp.eq.s32.totalorder %s22, 3
      %p164 = por %p162, %p163
      %p165 = scmp.ne.s32.totalorder %s156, %s157
      %p166 = scmp.eq.s32.totalorder %s22, 0
      %p167 = por %p165, %p166
      %p168 = scmp.ne.s32.totalorder %s156, %s157
      %p169 = scmp.eq.s32.totalorder %s23, 3
      %p170 = por %p168, %p169
      %p172 = scmp.ne.s32.totalorder %s157, %s171
      %p173 = scmp.eq.s32.totalorder %s23, 0
      %p174 = por %p172, %p173
      %s175 = ssub.s32 %s24, %s36
      %p176 = scmp.eq.s32.totalorder %s175, 0
      %s178 = sadd.s32 %s177, 1
      %s179 = scalar_select %p176, %s177, %s178
      %p182 = pneg %p176
      %p183 = scmp.eq.s32.totalorder %s17, 3
      %p184 = por %p182, %p183
      %p185 = scmp.ne.s32.totalorder %s177, %s180
      %p186 = scmp.eq.s32.totalorder %s17, 0
      %p187 = por %p185, %p186
      %p188 = scmp.ne.s32.totalorder %s177, %s180
      %p189 = scmp.eq.s32.totalorder %s22, 3
      %p190 = por %p188, %p189
      %p191 = scmp.ne.s32.totalorder %s180, %s181
      %p192 = scmp.eq.s32.totalorder %s22, 0
      %p193 = por %p191, %p192
      %p194 = scmp.ne.s32.totalorder %s180, %s181
      %p195 = scmp.eq.s32.totalorder %s23, 3
      %p196 = por %p194, %p195
      %p198 = scmp.ne.s32.totalorder %s181, %s197
      %p199 = scmp.eq.s32.totalorder %s23, 0
      %p200 = por %p198, %p199
      %p201 = scmp.le.s32.totalorder 1, %s17
      %p202 = scmp.lt.s32.totalorder %s17, 5
      %p203 = pnand %p201, %p202
      %p204 = pneg %p203
      // Predicated region
      $region9: #{tpu_custom_call.1} parent=5 // pred_check
        _
      $region10: #{tpu_custom_call.1} parent=5 // pred_check_branch
        %206 = sbr.rel (%p203) target = $region12
      $region11: #{tpu_custom_call.1} parent=5 // pred_region
        %s207 = ssub.s32 %s17, 1
        // Predicated region
        $region13: #{tpu_custom_call.1} parent=11 // pred_check
          %p208 = pneg %p104
        $region14: #{tpu_custom_call.1} parent=11 // pred_check_branch
          %210 = sbr.rel (%p208) target = $region16
        $region15: #{tpu_custom_call.1} parent=11 // pred_region
          %212 = vsyncadd [#allocation5], 0
          %s213 = sshll.u32 %s2, 4
          %s214 = int_to_ptr.hbm [resolvable:$true] %s213
          %s215 = sshll.u32 [#allocation4], 4
          %s216 = int_to_ptr.vmem [resolvable:$true] %s215
          %221 = dma.hbm_to_vmem [thread:$0]  %s214, 512, %s216, [#allocation5], 256, 256, 16
        $region16: #{tpu_custom_call.1} parent=11 // pred_fallthru
          _
        // Predicated region
        $region17: #{tpu_custom_call.1} parent=11 // pred_check
          %p222 = pneg %p125
        $region18: #{tpu_custom_call.1} parent=11 // pred_check_branch
          %224 = sbr.rel (%p222) target = $region20
        $region19: #{tpu_custom_call.1} parent=11 // pred_region
          _
        $region20: #{tpu_custom_call.1} parent=11 // pred_fallthru
          _
        // Predicated region
        $region21: #{tpu_custom_call.1} parent=11 // pred_check
          %p225 = pneg %p146
        $region22: #{tpu_custom_call.1} parent=11 // pred_check_branch
          %227 = sbr.rel (%p225) target = $region24
        $region23: #{tpu_custom_call.1} parent=11 // pred_region
          _
        $region24: #{tpu_custom_call.1} parent=11 // pred_fallthru
          _
        // Predicated region
        $region25: #{tpu_custom_call.1} parent=11 // pred_check
          %p228 = pneg %p167
        $region26: #{tpu_custom_call.1} parent=11 // pred_check_branch
          %230 = sbr.rel (%p228) target = $region28
        $region27: #{tpu_custom_call.1} parent=11 // pred_region
          _
        $region28: #{tpu_custom_call.1} parent=11 // pred_fallthru
          _
      $region12: #{tpu_custom_call.1} parent=5 // pred_fallthru
        _
      %p231 = scmp.lt.s32.totalorder %s17, 4
      // Predicated region
      $region29: #{tpu_custom_call.1} parent=5 // pred_check
        %p232 = pneg %p231
      $region30: #{tpu_custom_call.1} parent=5 // pred_check_branch
        %234 = sbr.rel (%p232) target = $region32
      $region31: #{tpu_custom_call.1} parent=5 // pred_region
        // Predicated region
        $region33: #{tpu_custom_call.1} parent=31 // pred_check
          %p235 = pneg %p51
        $region34: #{tpu_custom_call.1} parent=31 // pred_check_branch
          %237 = sbr.rel (%p235) target = $region36
        $region35: #{tpu_custom_call.1} parent=31 // pred_region
          %s238 = smul.u32 2, %s25
          %p239 = scmp.lt.s32.totalorder %s24, 1
          %s240 = scalar_select %p239, %s24, 1
          %p241 = scmp.lt.s32.totalorder %s238, 3
          %s242 = scalar_select %p241, %s238, 3
          %s243 = smul.addr %s242, 2
          %s244 = smul.addr %s240, 8
          %s245 = sadd.s32 %s243, %s244
          %s246 = smul.addr %s245, 4
          %s247 = scalar_lea.vmem %s0, %s246
          %s248 = smul.u32 2, %s25
        $region36: #{tpu_custom_call.1} parent=31 // pred_fallthru
          _
        // Predicated region
        $region37: #{tpu_custom_call.1} parent=31 // pred_check
          %p249 = pneg %p77
        $region38: #{tpu_custom_call.1} parent=31 // pred_check_branch
          %251 = sbr.rel (%p249) target = $region40
        $region39: #{tpu_custom_call.1} parent=31 // pred_region
          %p252 = scmp.lt.s32.totalorder %s25, 1
          %s253 = scalar_select %p252, %s25, 1
          %s254 = smul.addr %s253, 9
          %s255 = smul.addr %s254, 4
          %s256 = scalar_lea.vmem %s1, %s255
        $region40: #{tpu_custom_call.1} parent=31 // pred_fallthru
          _
      $region32: #{tpu_custom_call.1} parent=5 // pred_fallthru
        _
      %p257 = scmp.le.s32.totalorder 1, %s17
      %p258 = scmp.lt.s32.totalorder %s17, 5
      %p259 = pnand %p257, %p258
      %p260 = pneg %p259
      // Predicated region
      $region41: #{tpu_custom_call.1} parent=5 // pred_check
        _
      $region42: #{tpu_custom_call.1} parent=5 // pred_check_branch
        %262 = sbr.rel (%p259) target = $region44
      $region43: #{tpu_custom_call.1} parent=5 // pred_region
        %s263 = ssub.s32 %s17, 1
        // Predicated region
        $region45: #{tpu_custom_call.1} parent=43 // pred_check
          %p264 = pneg %p104
        $region46: #{tpu_custom_call.1} parent=43 // pred_check_branch
          %266 = sbr.rel (%p264) target = $region48
        $region47: #{tpu_custom_call.1} parent=43 // pred_region
          %268 = dma.done [#allocation5], 512
        $region48: #{tpu_custom_call.1} parent=43 // pred_fallthru
          _
        %s269 = smul.u32 2, %s27
        %p270 = scmp.lt.s32.totalorder %s26, 1
        %s271 = scalar_select %p270, %s26, 1
        %p272 = scmp.lt.s32.totalorder %s269, 3
        %s273 = scalar_select %p272, %s269, 3
        %s274 = smul.addr %s273, 2
        %s275 = smul.addr %s271, 8
        %s276 = sadd.s32 %s274, %s275
        %s277 = smul.addr %s276, 4
        %s278 = scalar_lea.vmem %s0, %s277
        %p279 = pneg %p57
        %p280 = pneg %p54
        %p281 = scmp.lt.s32.totalorder %s27, 1
        %s282 = scalar_select %p281, %s27, 1
        %s283 = smul.addr %s282, 9
        %s284 = smul.addr %s283, 4
        %s285 = scalar_lea.vmem %s1, %s284
        %p286 = pneg %p83
        %p287 = pneg %p80
        %p288 = pneg %p104
        %p289 = pneg %p101
        %p290 = pneg %p125
        %p291 = pneg %p122
        %p292 = pneg %p146
        %p293 = pneg %p143
        %p294 = pneg %p167
        %p295 = pneg %p164
        %p296 = pneg %p193
        %p297 = pneg %p190
        %s298 = sand.u32 %s180, 1
        %s299 = scalar_lea.sflag [#allocation6], %s298
        %s300 = sand.u32 %s180, 1
        %s301 = smul.addr %s300, 2
        %s302 = scalar_lea.vmem [#allocation7], %s301
        %s303 = smul.u32 2, %s27
        %p304 = scmp.lt.s32.totalorder %s26, 1
        %s305 = scalar_select %p304, %s26, 1
        %p306 = scmp.lt.s32.totalorder %s303, 3
        %s307 = scalar_select %p306, %s303, 3
        %s308 = smul.addr %s307, 2
        %s309 = smul.addr %s305, 8
        %s310 = sadd.s32 %s308, %s309
        %s311 = smul.addr %s310, 4
        %s312 = scalar_lea.vmem %s0, %s311
        %s313 = smul.u32 2, %s27
        %p314 = scmp.lt.s32.totalorder %s27, 1
        %s315 = scalar_select %p314, %s27, 1
        %s316 = smul.addr %s315, 9
        %s317 = smul.addr %s316, 4
        %s318 = scalar_lea.vmem %s1, %s317
        %v320 = vld [vmem:[%s312] sm:$0xff]
        %v321 = vld [vmem:[%s312 + $0x8] sm:$0xff]
        %v322 = vld [vmem:[%s318] sm:$0xf]
        %v323 = vld [vmem:[%s318 + $0x4] sm:$0xf]
        %v324 = vld [vmem:[%s318 + $0x8] sm:$0xf]
        %v325 = vld [vmem:[%s318 + $0xc] sm:$0xf]
        %v326 = vld [vmem:[%s318 + $0x10] sm:$0xf]
        %v327 = vld [vmem:[%s318 + $0x14] sm:$0xf]
        %v328 = vld [vmem:[%s318 + $0x18] sm:$0xf]
        %v329 = vld [vmem:[%s318 + $0x1c] sm:$0xf]
        %v330 = vld [vmem:[%s318 + $0x20] sm:$0xf]
        %v340 = vunpack.c.l.b16 %v322
        %v341 = vunpack.c.l.b16 %v323
        %v342 = vunpack.c.l.b16 %v324
        %v343 = vunpack.c.l.b16 %v325
        %v344 = vunpack.c.l.b16 %v326
        %v345 = vunpack.c.l.b16 %v327
        %v346 = vunpack.c.l.b16 %v328
        %v347 = vunpack.c.l.b16 %v329
        %v348 = vunpack.c.l.b16 %v330
        %v349 = vpack.c.b16 %v341, %v340
        %v350 = vpack.c.b16 %v343, %v342
        %v351 = vpack.c.b16 %v345, %v344
        %v352 = vpack.c.b16 %v347, %v346
        %v353 = vpack.c.b16 %v348, %v348
        %v356 = vunpack.c.l.b16 %v320
        %v357 = vunpack.c.h.b16 %v320
        %v358 = vunpack.c.l.b16 %v321
        %v359 = vunpack.c.h.b16 %v321
        %v360 = vpack.c.b16 %v358, %v356
        %v361 = vpack.c.b16 %v359, %v357
        %vm364 = vcmask 130048
        %v366 = vsel %vm364, %v349, 0
        %v369 = vsel %vm364, %v350, 0
        %v372 = vsel %vm364, %v351, 0
        %v375 = vsel %vm364, %v352, 0
        %v378 = vsel %vm364, %v353, 0
        %380 = vmatpush.bf16.msra.mxu0 0
        %381 = vmatpush.bf16.msra.mxu0 0
        %382 = vmatpush.bf16.msra.mxu0 0
        %383 = vmatpush.bf16.msra.mxu0 0
        %384 = vmatpush.bf16.msra.mxu0 0
        %385 = vmatpush.bf16.msra.mxu0 0
        %386 = vmatpush.bf16.msra.mxu0 0
        %387 = vmatpush.bf16.msra.mxu0 %v360
        %388 = vmatmul.bf16.gmra.mxu0 %v366
        %v389 = vpop.f32.mrf.mxu0
        %v390 = vadd.f32 0.0, %v389
        %v391 = vpop.f32.mrf.mxu0
        %v392 = vadd.f32 0.0, %v391
        %393 = vmatmul.bf16.gmra.mxu0 %v369
        %v394 = vpop.f32.mrf.mxu0
        %v395 = vadd.f32 0.0, %v394
        %v396 = vpop.f32.mrf.mxu0
        %v397 = vadd.f32 0.0, %v396
        %398 = vmatmul.bf16.gmra.mxu0 %v372
        %v399 = vpop.f32.mrf.mxu0
        %v400 = vadd.f32 0.0, %v399
        %v401 = vpop.f32.mrf.mxu0
        %v402 = vadd.f32 0.0, %v401
        %403 = vmatmul.bf16.gmra.mxu0 %v375
        %v404 = vpop.f32.mrf.mxu0
        %v405 = vadd.f32 0.0, %v404
        %v406 = vpop.f32.mrf.mxu0
        %v407 = vadd.f32 0.0, %v406
        %408 = vmatmul.bf16.gmra.mxu0 %v378
        %v409 = vpop.f32.mrf.mxu0
        %v410 = vadd.f32 0.0, %v409
        %v411 = vpop.f32.mrf.mxu0
        %412 = vdwg.mxu0
        %413 = vmatpush.bf16.msra.mxu0 0
        %414 = vmatpush.bf16.msra.mxu0 0
        %415 = vmatpush.bf16.msra.mxu0 0
        %416 = vmatpush.bf16.msra.mxu0 0
        %417 = vmatpush.bf16.msra.mxu0 0
        %418 = vmatpush.bf16.msra.mxu0 0
        %419 = vmatpush.bf16.msra.mxu0 0
        %420 = vmatpush.bf16.msra.mxu0 %v361
        %421 = vmatmul.bf16.gmra.mxu0 %v366
        %v422 = vpop.f32.mrf.mxu0
        %v423 = vadd.f32 0.0, %v422
        %v424 = vpop.f32.mrf.mxu0
        %v425 = vadd.f32 0.0, %v424
        %426 = vmatmul.bf16.gmra.mxu0 %v369
        %v427 = vpop.f32.mrf.mxu0
        %v428 = vadd.f32 0.0, %v427
        %v429 = vpop.f32.mrf.mxu0
        %v430 = vadd.f32 0.0, %v429
        %431 = vmatmul.bf16.gmra.mxu0 %v372
        %v432 = vpop.f32.mrf.mxu0
        %v433 = vadd.f32 0.0, %v432
        %v434 = vpop.f32.mrf.mxu0
        %v435 = vadd.f32 0.0, %v434
        %436 = vmatmul.bf16.gmra.mxu0 %v375
        %v437 = vpop.f32.mrf.mxu0
        %v438 = vadd.f32 0.0, %v437
        %v439 = vpop.f32.mrf.mxu0
        %v440 = vadd.f32 0.0, %v439
        %441 = vmatmul.bf16.gmra.mxu0 %v378
        %v442 = vpop.f32.mrf.mxu0
        %v443 = vadd.f32 0.0, %v442
        %v444 = vpop.f32.mrf.mxu0
        %445 = vdwg.mxu0
        %v446 = vld [vmem:[#allocation4] sm:$0xff]
        %v447 = vld [vmem:[#allocation4 + $0x8] sm:$0xff]
        %v448 = vld [vmem:[#allocation4 + $0x10] sm:$0x1]
        %v449 = vld [vmem:[#allocation4 + $0x18] sm:$0x1]
        %450 = vrot.lane.b32.xlu0 %v390, 17
        %v451 = vpop.permute.xlu0 %450
        %452 = vrot.lane.b32.xlu0 %v423, 17
        %v453 = vpop.permute.xlu0 %452
        %v454 = vlaneseq
        %v455 = vand.u32 %v454, 127
        %vm456 = vcmp.lt.s32.totalorder %v455, 17
        %v457 = vsel %vm456, %v451, %v453
        %v458 = vsel %vm456, %v453, %v451
        %v459 = vperm.slane %v446, 0
        %v460 = vperm.slane %v447, 0
        %v461 = vmul.f32 %v458, %v459
        %v462 = vmul.f32 %v457, %v460
        %463 = vrot.lane.b32.xlu0 %v392, 16
        %v464 = vpop.permute.xlu0 %463
        %465 = vrot.lane.b32.xlu0 %v425, 16
        %v466 = vpop.permute.xlu0 %465
        %vm467 = vcmp.lt.s32.totalorder %v455, 16
        %v468 = vsel %vm467, %v464, %v466
        %v469 = vsel %vm467, %v466, %v464
        %v470 = vperm.slane %v446, 1
        %v471 = vperm.slane %v447, 1
        %v472 = vmul.f32 %v469, %v470
        %v473 = vmul.f32 %v468, %v471
        %v474 = vadd.f32 %v461, %v472
        %v475 = vadd.f32 %v462, %v473
        %476 = vrot.lane.b32.xlu0 %v395, 15
        %v477 = vpop.permute.xlu0 %476
        %478 = vrot.lane.b32.xlu0 %v428, 15
        %v479 = vpop.permute.xlu0 %478
        %vm480 = vcmp.lt.s32.totalorder %v455, 15
        %v481 = vsel %vm480, %v477, %v479
        %v482 = vsel %vm480, %v479, %v477
        %v483 = vperm.slane %v446, 2
        %v484 = vperm.slane %v447, 2
        %v485 = vmul.f32 %v482, %v483
        %v486 = vmul.f32 %v481, %v484
        %v487 = vadd.f32 %v474, %v485
        %v488 = vadd.f32 %v475, %v486
        %489 = vrot.lane.b32.xlu0 %v397, 1
        %v490 = vpop.permute.xlu0 %489
        %491 = vrot.lane.b32.xlu0 %v430, 1
        %v492 = vpop.permute.xlu0 %491
        %vm493 = vcmp.lt.s32.totalorder %v455, 1
        %v494 = vsel %vm493, %v490, %v492
        %v495 = vsel %vm493, %v492, %v490
        %v496 = vperm.slane %v446, 3
        %v497 = vperm.slane %v447, 3
        %v498 = vmul.f32 %v495, %v496
        %v499 = vmul.f32 %v494, %v497
        %v500 = vadd.f32 %v487, %v498
        %v501 = vadd.f32 %v488, %v499
        %v502 = vadd.f32 %v500, %v400
        %v503 = vadd.f32 %v501, %v433
        %504 = vrot.lane.b32.xlu0 %v402, 127
        %v505 = vpop.permute.xlu0 %504
        %506 = vrot.lane.b32.xlu0 %v435, 127
        %v507 = vpop.permute.xlu0 %506
        %vm508 = vcmp.lt.s32.totalorder %v455, 127
        %v509 = vsel %vm508, %v505, %v507
        %v510 = vsel %vm508, %v507, %v505
        %v511 = vperm.slane %v446, 5
        %v512 = vperm.slane %v447, 5
        %v513 = vmul.f32 %v509, %v511
        %v514 = vmul.f32 %v510, %v512
        %v515 = vadd.f32 %v502, %v513
        %v516 = vadd.f32 %v503, %v514
        %517 = vrot.lane.b32.xlu0 %v405, 113
        %v518 = vpop.permute.xlu0 %517
        %519 = vrot.lane.b32.xlu0 %v438, 113
        %v520 = vpop.permute.xlu0 %519
        %vm521 = vcmp.lt.s32.totalorder %v455, 113
        %v522 = vsel %vm521, %v518, %v520
        %v523 = vsel %vm521, %v520, %v518
        %v524 = vperm.slane %v446, 6
        %v525 = vperm.slane %v447, 6
        %v526 = vmul.f32 %v522, %v524
        %v527 = vmul.f32 %v523, %v525
        %v528 = vadd.f32 %v515, %v526
        %v529 = vadd.f32 %v516, %v527
        %530 = vrot.lane.b32.xlu0 %v407, 112
        %v531 = vpop.permute.xlu0 %530
        %532 = vrot.lane.b32.xlu0 %v440, 112
        %v533 = vpop.permute.xlu0 %532
        %vm534 = vcmp.lt.s32.totalorder %v455, 112
        %v535 = vsel %vm534, %v531, %v533
        %v536 = vsel %vm534, %v533, %v531
        %v537 = vperm.slane %v446, 7
        %v538 = vperm.slane %v447, 7
        %v539 = vmul.f32 %v535, %v537
        %v540 = vmul.f32 %v536, %v538
        %v541 = vadd.f32 %v528, %v539
        %v542 = vadd.f32 %v529, %v540
        %543 = vrot.lane.b32.xlu0 %v410, 111
        %v544 = vpop.permute.xlu0 %543
        %545 = vrot.lane.b32.xlu0 %v443, 111
        %v546 = vpop.permute.xlu0 %545
        %vm547 = vcmp.lt.s32.totalorder %v455, 111
        %v548 = vsel %vm547, %v544, %v546
        %v549 = vsel %vm547, %v546, %v544
        %v550 = vperm.slane %v448, 0
        %v551 = vperm.slane %v449, 0
        %v552 = vmul.f32 %v548, %v550
        %v553 = vmul.f32 %v549, %v551
        %v554 = vadd.f32 %v541, %v552
        %v555 = vadd.f32 %v542, %v553
        %p556 = scmp.eq.s32.totalorder %s27, 0
        // Predicated region
        $region49: #{tpu_custom_call.1} parent=43 // pred_check
          %p557 = pneg %p556
        $region50: #{tpu_custom_call.1} parent=43 // pred_check_branch
          %559 = sbr.rel (%p557) target = $region52
        $region51: #{tpu_custom_call.1} parent=43 // pred_region
          %560 = vst [vmem:[#allocation2] sm:$0xff] %v554
          %561 = vst [vmem:[#allocation2 + $0x8] sm:$0xff] %v555
        $region52: #{tpu_custom_call.1} parent=43 // pred_fallthru
          _
        %p562 = scmp.gt.s32.totalorder %s27, 0
        // Predicated region
        $region53: #{tpu_custom_call.1} parent=43 // pred_check
          %p563 = pneg %p562
        $region54: #{tpu_custom_call.1} parent=43 // pred_check_branch
          %565 = sbr.rel (%p563) target = $region56
        $region55: #{tpu_custom_call.1} parent=43 // pred_region
          %v566 = vld [vmem:[#allocation2] sm:$0xff]
          %v567 = vld [vmem:[#allocation2 + $0x8] sm:$0xff]
          %v568 = vadd.f32 %v566, %v554
          %v569 = vadd.f32 %v567, %v555
          %570 = vst [vmem:[#allocation2] sm:$0xff] %v568
          %571 = vst [vmem:[#allocation2 + $0x8] sm:$0xff] %v569
        $region56: #{tpu_custom_call.1} parent=43 // pred_fallthru
          _
        %p572 = scmp.eq.s32.totalorder %s27, 1
        // Predicated region
        $region57: #{tpu_custom_call.1} parent=43 // pred_check
          %p573 = pneg %p572
        $region58: #{tpu_custom_call.1} parent=43 // pred_check_branch
          %575 = sbr.rel (%p573) target = $region60
        $region59: #{tpu_custom_call.1} parent=43 // pred_region
          %v576 = vld [vmem:[#allocation2] sm:$0xff]
          %v577 = vld [vmem:[#allocation2 + $0x8] sm:$0xff]
          %v578 = vld [vmem:[%s3] sm:$0xff]
          %580 = vset.pattern.permute.xlu0 0
          %581 = vperm.xlu0 %580, %v578
          %v582 = vpop.permute.xlu0 %581
          %v584 = vadd.f32 %v576, %v582
          %v585 = vadd.f32 %v577, %v582
          %v586 = vmax.f32 %v584, 0.0
          %v587 = vmax.f32 %v585, 0.0
          %v588 = vld [vmem:[%s4] sm:$0xff]
          %590 = vset.pattern.permute.xlu0 0
          %591 = vperm.xlu0 %590, %v588
          %v592 = vpop.permute.xlu0 %591
          %v594 = vmul.f32 %v586, %v592
          %v595 = vmul.f32 %v587, %v592
          %v596 = vrot.slane %v594, 4
          %v597 = vadd.f32 %v594, %v596
          %v598 = vrot.slane %v597, 2
          %v599 = vadd.f32 %v597, %v598
          %v600 = vrot.slane %v599, 1
          %v601 = vadd.f32 %v599, %v600
          %v602 = vrot.slane %v595, 4
          %v603 = vadd.f32 %v595, %v602
          %v604 = vrot.slane %v603, 2
          %v605 = vadd.f32 %v603, %v604
          %v606 = vrot.slane %v605, 1
          %v607 = vadd.f32 %v605, %v606
          %s608 = sld [smem:[#allocation3]]
          %v609 = vstv %s608
          %v610 = vadd.f32 %v601, %v609
          %v611 = vadd.f32 %v607, %v609
          %v614 = vrot.slane %v611, 7
          %vm615 = vcmask 1040384
          %v616 = vsel %vm615, %v610, %v614
          %v618 = vlaneseq
          %vm619 = vcmp.ge.s32.totalorder %v618, 0
          %vm620 = vcmp.lt.s32.totalorder %v618, 256
          %vm621 = vmand %vm619, %vm620
          %622 = vst.msk [vmem:[%s302] sm:$0x3] %vm621, %v616
        $region60: #{tpu_custom_call.1} parent=43 // pred_fallthru
          _
        %s623 = sand.u32 %s180, 1
        %s624 = scalar_lea.sflag [#allocation6], %s623
        %s625 = sand.u32 %s180, 1
        %s626 = smul.addr %s625, 2
        %s627 = scalar_lea.vmem [#allocation7], %s626
        // Predicated region
        $region61: #{tpu_custom_call.1} parent=43 // pred_check
          %p628 = pneg %p190
        $region62: #{tpu_custom_call.1} parent=43 // pred_check_branch
          %630 = sbr.rel (%p628) target = $region64
        $region63: #{tpu_custom_call.1} parent=43 // pred_region
          %632 = vsyncadd %s624, 0
          %s633 = smul.addr %s26, 2
          %s634 = scalar_lea.hbm %s6, %s633
          %s636 = sshll.u32 %s627, 4
          %s637 = int_to_ptr.vmem [resolvable:$true] %s636
          %s638 = sshll.u32 %s634, 4
          %s639 = int_to_ptr.hbm [resolvable:$true] %s638
          %641 = dma.vmem_to_hbm [thread:$0]  %s637, 32, %s639, %s624
        $region64: #{tpu_custom_call.1} parent=43 // pred_fallthru
          _
      $region44: #{tpu_custom_call.1} parent=5 // pred_fallthru
        _
      %p642 = scmp.le.s32.totalorder 2, %s17
      // Predicated region
      $region65: #{tpu_custom_call.1} parent=5 // pred_check
        %p643 = pneg %p642
      $region66: #{tpu_custom_call.1} parent=5 // pred_check_branch
        %645 = sbr.rel (%p643) target = $region68
      $region67: #{tpu_custom_call.1} parent=5 // pred_region
        %s646 = ssub.s32 %s17, 2
        // Predicated region
        $region69: #{tpu_custom_call.1} parent=67 // pred_check
          %p647 = pneg %p196
        $region70: #{tpu_custom_call.1} parent=67 // pred_check_branch
          %649 = sbr.rel (%p647) target = $region72
        $region71: #{tpu_custom_call.1} parent=67 // pred_region
          %s650 = sand.u32 %s181, 1
          %s651 = scalar_lea.sflag [#allocation6], %s650
          %s652 = sand.u32 %s181, 1
          %s653 = smul.addr %s652, 2
          %s654 = scalar_lea.vmem [#allocation7], %s653
          %656 = dma.done %s651, 32
        $region72: #{tpu_custom_call.1} parent=67 // pred_fallthru
          _
      $region68: #{tpu_custom_call.1} parent=5 // pred_fallthru
        _
    $region6: #{tpu_custom_call.1} parent=1 // loop_footer
      %s21 = sadd.s32 1, %s17
    $region7: #{tpu_custom_call.1} parent=1 // loop_footer_branch
      %16 = sbr.rel target = $region3
    $region8: #{tpu_custom_call.1} parent=1 // loop_exit
      _
    %657 = vsyncpa [#allocation5], 1
    %s658 = scalar_lea.sflag [#allocation5], 1
    %659 = vsyncpa %s658, 1
    %660 = vsyncpa [#allocation6], 1
    %s661 = scalar_lea.sflag [#allocation6], 1
    %662 = vsyncpa %s661, 1

</llo_original>
